<compile_context>
chip_gen: v7x
topology: tpu7x:2x2x1
jax: 0.10.0
libtpu: 0.0.40
codegen_flags: <defaults>
</compile_context>

<pallas_src>
import jax
import jax.numpy as jnp
from jax.experimental import pallas as pl
from jax.experimental.pallas import tpu as pltpu

BN_EPS = 1e-5

# ---------------- packed parameter slab (56, 128) f32 -----------------------
# rows  0.. 5 : vectors (all slices start at lane 0)
#   row 0: bn1 gamma   (lanes 0:7)
#   row 1: bn1 beta    (lanes 0:7)
#   row 2: fc1 bias    (lanes 0:32)
#   row 3: bn2 gamma   (lanes 0:32)
#   row 4: bn2 beta    (lanes 0:32)
#   row 5: fc2 bias    (lanes 7:23)   <- pre-shifted to the output layout
# rows  8..14 : fc1_w.T  (7, 32)  at lanes 0:32
# rows 16..47 : W2aug    (32, 23): lanes 0:7 zero, lanes 7:23 = fc2_w.T
# rows 48..54 : ECHO     (7, 23):  lanes 0:7 = I_7, lanes 7:23 zero
# remaining rows are zero padding (sublane-tile alignment).
_SLAB_ROWS = 56
_SLAB_LANES = 128


def pack_params(params):
    """Build the parameter slab ONCE (hoisted out of the per-call path)."""
    f32 = jnp.float32
    slab = jnp.zeros((_SLAB_ROWS, _SLAB_LANES), f32)
    slab = slab.at[0, 0:7].set(jnp.asarray(params["bn1_g"], f32))
    slab = slab.at[1, 0:7].set(jnp.asarray(params["bn1_b"], f32))
    slab = slab.at[2, 0:32].set(jnp.asarray(params["fc1_b"], f32))
    slab = slab.at[3, 0:32].set(jnp.asarray(params["bn2_g"], f32))
    slab = slab.at[4, 0:32].set(jnp.asarray(params["bn2_b"], f32))
    slab = slab.at[5, 7:23].set(jnp.asarray(params["fc2_b"], f32))
    slab = slab.at[8:15, 0:32].set(jnp.asarray(params["fc1_w"], f32).T)    # (7, 32)
    slab = slab.at[16:48, 7:23].set(jnp.asarray(params["fc2_w"], f32).T)   # (32, 16)
    slab = slab.at[48:55, 0:7].set(jnp.eye(7, dtype=f32))                  # echo block
    return slab


def _triplet_kernel(xa_ref, xp_ref, xn_ref, p_ref,
                    oa_ref, op_ref, on_ref):
    # One aligned VMEM load of the whole slab (28 KB); all slices start at
    # lane 0, weight blocks start on sublane-tile boundaries.
    p = p_ref[...]
    g1 = p[0:1, 0:7]
    b1 = p[1:2, 0:7]
    bf1 = p[2:3, 0:32]
    g2 = p[3:4, 0:32]
    b2 = p[4:5, 0:32]
    bf2 = p[5:6, 0:23]          # fc2 bias already at lanes 7:23
    w1 = p[8:15, 0:32]          # (7, 32)   fc1_w.T
    w2 = p[16:48, 0:23]         # (32, 23)  [0 | fc2_w.T]
    ech = p[48:55, 0:23]        # (7, 23)   [I_7 | 0]

    def forward_once(x_ref, o_ref):
        x = x_ref[...]                                          # (N, 7)

        # --- BatchNorm1d(7), training mode: batch mean / biased variance
        mu1 = jnp.mean(x, axis=0, keepdims=True)                # (1, 7)
        d1 = x - mu1
        var1 = jnp.mean(d1 * d1, axis=0, keepdims=True)
        xn = d1 * jax.lax.rsqrt(var1 + BN_EPS) * g1 + b1        # (N, 7)

        # --- fc1 (7 -> 32) + ReLU
        y = jnp.dot(xn, w1, preferred_element_type=jnp.float32) + bf1
        y = jnp.maximum(y, 0.0)                                 # (N, 32)

        # --- BatchNorm1d(32), training mode
        mu2 = jnp.mean(y, axis=0, keepdims=True)
        d2 = y - mu2
        var2 = jnp.mean(d2 * d2, axis=0, keepdims=True)
        y = d2 * jax.lax.rsqrt(var2 + BN_EPS) * g2 + b2         # (N, 32)

        # --- dropout(p=0.3): identity (deterministic forward).
        # TODO(synk): train-mode stochastic dropout would need pltpu.prng_seed
        # + pltpu.prng_random_bits; omitted to keep the forward deterministic.

        # --- fused fc2 (32 -> 16) + concat([x_hu, z], dim=1):
        #     lanes 0:7  = x @ I_7      (raw-input echo)
        #     lanes 7:23 = y @ fc2_w.T + fc2_b
        out = (jnp.dot(x, ech, preferred_element_type=jnp.float32)
               + jnp.dot(y, w2, preferred_element_type=jnp.float32)
               + bf2)                                           # (N, 23)
        o_ref[...] = out                                        # single full store

    # Statically unrolled 3-member loop; BN statistics are per member,
    # matching PyTorch's per-call batch stats.
    forward_once(xa_ref, oa_ref)
    forward_once(xp_ref, op_ref)
    forward_once(xn_ref, on_ref)


def triplet_net_bn2(anchor, positive, negative, param_slab):
    """anchor/positive/negative: (N, 7) f32 -> three (N, 23) f32 outputs."""
    n, c = anchor.shape
    assert c == 7
    out_sds = jax.ShapeDtypeStruct((n, 23), jnp.float32)
    x_spec = pl.BlockSpec((n, 7), lambda i: (0, 0))
    o_spec = pl.BlockSpec((n, 23), lambda i: (0, 0))
    p_spec = pl.BlockSpec((_SLAB_ROWS, _SLAB_LANES), lambda i: (0, 0))

    return pl.pallas_call(
        _triplet_kernel,
        out_shape=(out_sds, out_sds, out_sds),
        grid=(1,),
        in_specs=[x_spec, x_spec, x_spec, p_spec],
        out_specs=(o_spec, o_spec, o_spec),
        compiler_params=pltpu.CompilerParams(
            dimension_semantics=("arbitrary",),
            vmem_limit_bytes=32 * 1024 * 1024,
        ),
    )(anchor.astype(jnp.float32), positive.astype(jnp.float32),
      negative.astype(jnp.float32), param_slab)


# ---------------------------- reference & init ------------------------------
def _reference_once(x, params):
    """Plain-JAX reference of forward_once (correctness check)."""
    mu1 = jnp.mean(x, axis=0, keepdims=True)
    var1 = jnp.mean((x - mu1) ** 2, axis=0, keepdims=True)
    h = (x - mu1) / jnp.sqrt(var1 + BN_EPS) * params["bn1_g"] + params["bn1_b"]
    y = h @ params["fc1_w"].T + params["fc1_b"]
    y = jnp.maximum(y, 0.0)
    mu2 = jnp.mean(y, axis=0, keepdims=True)
    var2 = jnp.mean((y - mu2) ** 2, axis=0, keepdims=True)
    y = (y - mu2) / jnp.sqrt(var2 + BN_EPS) * params["bn2_g"] + params["bn2_b"]
    z = y @ params["fc2_w"].T + params["fc2_b"]
    return jnp.concatenate([x, z], axis=1)


def make_params(key):
    """Deterministic parameter init mirroring the module's shapes."""
    ks = jax.random.split(key, 8)
    return {
        "bn1_g": 1.0 + 0.1 * jax.random.normal(ks[0], (7,), jnp.float32),
        "bn1_b": 0.1 * jax.random.normal(ks[1], (7,), jnp.float32),
        "fc1_w": jax.random.normal(ks[2], (32, 7), jnp.float32) * 0.2,
        "fc1_b": jax.random.normal(ks[3], (32,), jnp.float32) * 0.05,
        "bn2_g": 1.0 + 0.1 * jax.random.normal(ks[4], (32,), jnp.float32),
        "bn2_b": 0.1 * jax.random.normal(ks[5], (32,), jnp.float32),
        "fc2_w": jax.random.normal(ks[6], (16, 32), jnp.float32) * 0.1,
        "fc2_b": jax.random.normal(ks[7], (16,), jnp.float32) * 0.05,
    }


if __name__ == "__main__":
    key = jax.random.PRNGKey(0)
    kp, ka, kq, kn = jax.random.split(key, 4)
    params = make_params(kp)
    slab = pack_params(params)          # packed ONCE, outside the forward path

    N = 8                               # batch size per triplet member
    anchor = jax.random.normal(ka, (N, 7), jnp.float32)
    positive = jax.random.normal(kq, (N, 7), jnp.float32)
    negative = jax.random.normal(kn, (N, 7), jnp.float32)

    forward = jax.jit(triplet_net_bn2)
    out_a, out_p, out_n = forward(anchor, positive, negative, slab)
    jax.block_until_ready((out_a, out_p, out_n))

    # sanity-check against the plain-JAX reference
    ra = _reference_once(anchor, params)
    rp = _reference_once(positive, params)
    rn = _reference_once(negative, params)
    assert out_a.shape == (N, 23) and out_p.shape == (N, 23) and out_n.shape == (N, 23)
    assert jnp.allclose(out_a, ra, rtol=1e-4, atol=1e-4)
    assert jnp.allclose(out_p, rp, rtol=1e-4, atol=1e-4)
    assert jnp.allclose(out_n, rn, rtol=1e-4, atol=1e-4)

    print("KERNEL_OK")
</pallas_src>

<mosaic_0001>
module attributes {stable_mosaic.version = 11 : i64} {
  func.func @_triplet_kernel(%arg0: i32, %arg1: memref<8x7xf32, #tpu.memory_space<vmem>>, %arg2: memref<8x7xf32, #tpu.memory_space<vmem>>, %arg3: memref<8x7xf32, #tpu.memory_space<vmem>>, %arg4: memref<56x128xf32, #tpu.memory_space<vmem>>, %arg5: memref<8x23xf32, #tpu.memory_space<vmem>>, %arg6: memref<8x23xf32, #tpu.memory_space<vmem>>, %arg7: memref<8x23xf32, #tpu.memory_space<vmem>>) attributes {dimension_semantics = [#tpu.dimension_semantics<arbitrary>], iteration_bounds = array<i64: 1>, scalar_prefetch = 0 : i64, scratch_operands = 0 : i64, tpu.core_type = #tpu.core_type<tc>, window_params = [{pipeline_mode = #tpu.pipeline_mode<synchronous>, transform_indices = @transform_0, window_bounds = array<i64: 8, 7>}, {pipeline_mode = #tpu.pipeline_mode<synchronous>, transform_indices = @transform_1, window_bounds = array<i64: 8, 7>}, {pipeline_mode = #tpu.pipeline_mode<synchronous>, transform_indices = @transform_2, window_bounds = array<i64: 8, 7>}, {pipeline_mode = #tpu.pipeline_mode<synchronous>, transform_indices = @transform_3, window_bounds = array<i64: 56, 128>}, {pipeline_mode = #tpu.pipeline_mode<synchronous>, transform_indices = @transform_4, window_bounds = array<i64: 8, 23>}, {pipeline_mode = #tpu.pipeline_mode<synchronous>, transform_indices = @transform_5, window_bounds = array<i64: 8, 23>}, {pipeline_mode = #tpu.pipeline_mode<synchronous>, transform_indices = @transform_6, window_bounds = array<i64: 8, 23>}]} {
    %c0 = arith.constant 0 : index
    %c0_0 = arith.constant 0 : index
    %0 = vector.load %arg4[%c0, %c0_0] : memref<56x128xf32, #tpu.memory_space<vmem>>, vector<56x128xf32>
    %1 = vector.extract_strided_slice %0 {offsets = [0, 0], sizes = [1, 7], strides = [1, 1]} : vector<56x128xf32> to vector<1x7xf32>
    %2 = vector.extract_strided_slice %0 {offsets = [1, 0], sizes = [1, 7], strides = [1, 1]} : vector<56x128xf32> to vector<1x7xf32>
    %3 = vector.extract_strided_slice %0 {offsets = [2, 0], sizes = [1, 32], strides = [1, 1]} : vector<56x128xf32> to vector<1x32xf32>
    %4 = vector.extract_strided_slice %0 {offsets = [3, 0], sizes = [1, 32], strides = [1, 1]} : vector<56x128xf32> to vector<1x32xf32>
    %5 = vector.extract_strided_slice %0 {offsets = [4, 0], sizes = [1, 32], strides = [1, 1]} : vector<56x128xf32> to vector<1x32xf32>
    %6 = vector.extract_strided_slice %0 {offsets = [5, 0], sizes = [1, 23], strides = [1, 1]} : vector<56x128xf32> to vector<1x23xf32>
    %7 = vector.extract_strided_slice %0 {offsets = [8, 0], sizes = [7, 32], strides = [1, 1]} : vector<56x128xf32> to vector<7x32xf32>
    %8 = vector.extract_strided_slice %0 {offsets = [16, 0], sizes = [32, 23], strides = [1, 1]} : vector<56x128xf32> to vector<32x23xf32>
    %9 = vector.extract_strided_slice %0 {offsets = [48, 0], sizes = [7, 23], strides = [1, 1]} : vector<56x128xf32> to vector<7x23xf32>
    %c0_1 = arith.constant 0 : index
    %c0_2 = arith.constant 0 : index
    %10 = vector.load %arg1[%c0_1, %c0_2] : memref<8x7xf32, #tpu.memory_space<vmem>>, vector<8x7xf32>
    %cst = arith.constant dense<0.000000e+00> : vector<7xf32>
    %11 = vector.multi_reduction <add>, %10, %cst [0] : vector<8x7xf32> to vector<7xf32>
    %12 = vector.shape_cast %11 : vector<7xf32> to vector<1x7xf32>
    %cst_3 = arith.constant 8.000000e+00 : f32
    %13 = vector.broadcast %cst_3 : f32 to vector<1x7xf32>
    %14 = arith.divf %12, %13 : vector<1x7xf32>
    %15 = vector.broadcast %14 : vector<1x7xf32> to vector<8x7xf32>
    %16 = arith.subf %10, %15 : vector<8x7xf32>
    %17 = arith.mulf %16, %16 : vector<8x7xf32>
    %cst_4 = arith.constant dense<0.000000e+00> : vector<7xf32>
    %18 = vector.multi_reduction <add>, %17, %cst_4 [0] : vector<8x7xf32> to vector<7xf32>
    %19 = vector.shape_cast %18 : vector<7xf32> to vector<1x7xf32>
    %cst_5 = arith.constant 8.000000e+00 : f32
    %20 = vector.broadcast %cst_5 : f32 to vector<1x7xf32>
    %21 = arith.divf %19, %20 : vector<1x7xf32>
    %cst_6 = arith.constant 9.99999974E-6 : f32
    %22 = vector.broadcast %cst_6 : f32 to vector<1x7xf32>
    %23 = arith.addf %21, %22 : vector<1x7xf32>
    %24 = math.rsqrt %23 : vector<1x7xf32>
    %25 = vector.broadcast %24 : vector<1x7xf32> to vector<8x7xf32>
    %26 = arith.mulf %16, %25 : vector<8x7xf32>
    %27 = vector.broadcast %1 : vector<1x7xf32> to vector<8x7xf32>
    %28 = arith.mulf %26, %27 : vector<8x7xf32>
    %29 = vector.broadcast %2 : vector<1x7xf32> to vector<8x7xf32>
    %30 = arith.addf %28, %29 : vector<8x7xf32>
    %cst_7 = arith.constant dense<0.000000e+00> : vector<8x32xf32>
    %31 = tpu.matmul %30, %7, %cst_7 {dimension_numbers = #tpu.dot_dimension_numbers<[1], [0], [0], [1], [0, 0, 1, 1], [], []>} : vector<8x7xf32>, vector<7x32xf32>, vector<8x32xf32> -> vector<8x32xf32>
    %32 = vector.broadcast %3 : vector<1x32xf32> to vector<8x32xf32>
    %33 = arith.addf %31, %32 : vector<8x32xf32>
    %cst_8 = arith.constant 0.000000e+00 : f32
    %34 = vector.broadcast %cst_8 : f32 to vector<8x32xf32>
    %35 = arith.maximumf %33, %34 : vector<8x32xf32>
    %cst_9 = arith.constant dense<0.000000e+00> : vector<32xf32>
    %36 = vector.multi_reduction <add>, %35, %cst_9 [0] : vector<8x32xf32> to vector<32xf32>
    %37 = vector.shape_cast %36 : vector<32xf32> to vector<1x32xf32>
    %cst_10 = arith.constant 8.000000e+00 : f32
    %38 = vector.broadcast %cst_10 : f32 to vector<1x32xf32>
    %39 = arith.divf %37, %38 : vector<1x32xf32>
    %40 = vector.broadcast %39 : vector<1x32xf32> to vector<8x32xf32>
    %41 = arith.subf %35, %40 : vector<8x32xf32>
    %42 = arith.mulf %41, %41 : vector<8x32xf32>
    %cst_11 = arith.constant dense<0.000000e+00> : vector<32xf32>
    %43 = vector.multi_reduction <add>, %42, %cst_11 [0] : vector<8x32xf32> to vector<32xf32>
    %44 = vector.shape_cast %43 : vector<32xf32> to vector<1x32xf32>
    %cst_12 = arith.constant 8.000000e+00 : f32
    %45 = vector.broadcast %cst_12 : f32 to vector<1x32xf32>
    %46 = arith.divf %44, %45 : vector<1x32xf32>
    %cst_13 = arith.constant 9.99999974E-6 : f32
    %47 = vector.broadcast %cst_13 : f32 to vector<1x32xf32>
    %48 = arith.addf %46, %47 : vector<1x32xf32>
    %49 = math.rsqrt %48 : vector<1x32xf32>
    %50 = vector.broadcast %49 : vector<1x32xf32> to vector<8x32xf32>
    %51 = arith.mulf %41, %50 : vector<8x32xf32>
    %52 = vector.broadcast %4 : vector<1x32xf32> to vector<8x32xf32>
    %53 = arith.mulf %51, %52 : vector<8x32xf32>
    %54 = vector.broadcast %5 : vector<1x32xf32> to vector<8x32xf32>
    %55 = arith.addf %53, %54 : vector<8x32xf32>
    %cst_14 = arith.constant dense<0.000000e+00> : vector<8x23xf32>
    %56 = tpu.matmul %10, %9, %cst_14 {dimension_numbers = #tpu.dot_dimension_numbers<[1], [0], [0], [1], [0, 0, 1, 1], [], []>} : vector<8x7xf32>, vector<7x23xf32>, vector<8x23xf32> -> vector<8x23xf32>
    %cst_15 = arith.constant dense<0.000000e+00> : vector<8x23xf32>
    %57 = tpu.matmul %55, %8, %cst_15 {dimension_numbers = #tpu.dot_dimension_numbers<[1], [0], [0], [1], [0, 0, 1, 1], [], []>} : vector<8x32xf32>, vector<32x23xf32>, vector<8x23xf32> -> vector<8x23xf32>
    %58 = arith.addf %56, %57 : vector<8x23xf32>
    %59 = vector.broadcast %6 : vector<1x23xf32> to vector<8x23xf32>
    %60 = arith.addf %58, %59 : vector<8x23xf32>
    %c0_16 = arith.constant 0 : index
    %c0_17 = arith.constant 0 : index
    %61 = vector.load %arg5[%c0_16, %c0_17] : memref<8x23xf32, #tpu.memory_space<vmem>>, vector<8x23xf32>
    tpu.vector_store %arg5[%c0_16, %c0_17], %60 {strides = array<i32>} : memref<8x23xf32, #tpu.memory_space<vmem>>, vector<8x23xf32>,
    %c0_18 = arith.constant 0 : index
    %c0_19 = arith.constant 0 : index
    %62 = vector.load %arg2[%c0_18, %c0_19] : memref<8x7xf32, #tpu.memory_space<vmem>>, vector<8x7xf32>
    %cst_20 = arith.constant dense<0.000000e+00> : vector<7xf32>
    %63 = vector.multi_reduction <add>, %62, %cst_20 [0] : vector<8x7xf32> to vector<7xf32>
    %64 = vector.shape_cast %63 : vector<7xf32> to vector<1x7xf32>
    %cst_21 = arith.constant 8.000000e+00 : f32
    %65 = vector.broadcast %cst_21 : f32 to vector<1x7xf32>
    %66 = arith.divf %64, %65 : vector<1x7xf32>
    %67 = vector.broadcast %66 : vector<1x7xf32> to vector<8x7xf32>
    %68 = arith.subf %62, %67 : vector<8x7xf32>
    %69 = arith.mulf %68, %68 : vector<8x7xf32>
    %cst_22 = arith.constant dense<0.000000e+00> : vector<7xf32>
    %70 = vector.multi_reduction <add>, %69, %cst_22 [0] : vector<8x7xf32> to vector<7xf32>
    %71 = vector.shape_cast %70 : vector<7xf32> to vector<1x7xf32>
    %cst_23 = arith.constant 8.000000e+00 : f32
    %72 = vector.broadcast %cst_23 : f32 to vector<1x7xf32>
    %73 = arith.divf %71, %72 : vector<1x7xf32>
    %cst_24 = arith.constant 9.99999974E-6 : f32
    %74 = vector.broadcast %cst_24 : f32 to vector<1x7xf32>
    %75 = arith.addf %73, %74 : vector<1x7xf32>
    %76 = math.rsqrt %75 : vector<1x7xf32>
    %77 = vector.broadcast %76 : vector<1x7xf32> to vector<8x7xf32>
    %78 = arith.mulf %68, %77 : vector<8x7xf32>
    %79 = vector.broadcast %1 : vector<1x7xf32> to vector<8x7xf32>
    %80 = arith.mulf %78, %79 : vector<8x7xf32>
    %81 = vector.broadcast %2 : vector<1x7xf32> to vector<8x7xf32>
    %82 = arith.addf %80, %81 : vector<8x7xf32>
    %cst_25 = arith.constant dense<0.000000e+00> : vector<8x32xf32>
    %83 = tpu.matmul %82, %7, %cst_25 {dimension_numbers = #tpu.dot_dimension_numbers<[1], [0], [0], [1], [0, 0, 1, 1], [], []>} : vector<8x7xf32>, vector<7x32xf32>, vector<8x32xf32> -> vector<8x32xf32>
    %84 = vector.broadcast %3 : vector<1x32xf32> to vector<8x32xf32>
    %85 = arith.addf %83, %84 : vector<8x32xf32>
    %cst_26 = arith.constant 0.000000e+00 : f32
    %86 = vector.broadcast %cst_26 : f32 to vector<8x32xf32>
    %87 = arith.maximumf %85, %86 : vector<8x32xf32>
    %cst_27 = arith.constant dense<0.000000e+00> : vector<32xf32>
    %88 = vector.multi_reduction <add>, %87, %cst_27 [0] : vector<8x32xf32> to vector<32xf32>
    %89 = vector.shape_cast %88 : vector<32xf32> to vector<1x32xf32>
    %cst_28 = arith.constant 8.000000e+00 : f32
    %90 = vector.broadcast %cst_28 : f32 to vector<1x32xf32>
    %91 = arith.divf %89, %90 : vector<1x32xf32>
    %92 = vector.broadcast %91 : vector<1x32xf32> to vector<8x32xf32>
    %93 = arith.subf %87, %92 : vector<8x32xf32>
    %94 = arith.mulf %93, %93 : vector<8x32xf32>
    %cst_29 = arith.constant dense<0.000000e+00> : vector<32xf32>
    %95 = vector.multi_reduction <add>, %94, %cst_29 [0] : vector<8x32xf32> to vector<32xf32>
    %96 = vector.shape_cast %95 : vector<32xf32> to vector<1x32xf32>
    %cst_30 = arith.constant 8.000000e+00 : f32
    %97 = vector.broadcast %cst_30 : f32 to vector<1x32xf32>
    %98 = arith.divf %96, %97 : vector<1x32xf32>
    %cst_31 = arith.constant 9.99999974E-6 : f32
    %99 = vector.broadcast %cst_31 : f32 to vector<1x32xf32>
    %100 = arith.addf %98, %99 : vector<1x32xf32>
    %101 = math.rsqrt %100 : vector<1x32xf32>
    %102 = vector.broadcast %101 : vector<1x32xf32> to vector<8x32xf32>
    %103 = arith.mulf %93, %102 : vector<8x32xf32>
    %104 = vector.broadcast %4 : vector<1x32xf32> to vector<8x32xf32>
    %105 = arith.mulf %103, %104 : vector<8x32xf32>
    %106 = vector.broadcast %5 : vector<1x32xf32> to vector<8x32xf32>
    %107 = arith.addf %105, %106 : vector<8x32xf32>
    %cst_32 = arith.constant dense<0.000000e+00> : vector<8x23xf32>
    %108 = tpu.matmul %62, %9, %cst_32 {dimension_numbers = #tpu.dot_dimension_numbers<[1], [0], [0], [1], [0, 0, 1, 1], [], []>} : vector<8x7xf32>, vector<7x23xf32>, vector<8x23xf32> -> vector<8x23xf32>
    %cst_33 = arith.constant dense<0.000000e+00> : vector<8x23xf32>
    %109 = tpu.matmul %107, %8, %cst_33 {dimension_numbers = #tpu.dot_dimension_numbers<[1], [0], [0], [1], [0, 0, 1, 1], [], []>} : vector<8x32xf32>, vector<32x23xf32>, vector<8x23xf32> -> vector<8x23xf32>
    %110 = arith.addf %108, %109 : vector<8x23xf32>
    %111 = vector.broadcast %6 : vector<1x23xf32> to vector<8x23xf32>
    %112 = arith.addf %110, %111 : vector<8x23xf32>
    %c0_34 = arith.constant 0 : index
    %c0_35 = arith.constant 0 : index
    %113 = vector.load %arg6[%c0_34, %c0_35] : memref<8x23xf32, #tpu.memory_space<vmem>>, vector<8x23xf32>
    tpu.vector_store %arg6[%c0_34, %c0_35], %112 {strides = array<i32>} : memref<8x23xf32, #tpu.memory_space<vmem>>, vector<8x23xf32>,
    %c0_36 = arith.constant 0 : index
    %c0_37 = arith.constant 0 : index
    %114 = vector.load %arg3[%c0_36, %c0_37] : memref<8x7xf32, #tpu.memory_space<vmem>>, vector<8x7xf32>
    %cst_38 = arith.constant dense<0.000000e+00> : vector<7xf32>
    %115 = vector.multi_reduction <add>, %114, %cst_38 [0] : vector<8x7xf32> to vector<7xf32>
    %116 = vector.shape_cast %115 : vector<7xf32> to vector<1x7xf32>
    %cst_39 = arith.constant 8.000000e+00 : f32
    %117 = vector.broadcast %cst_39 : f32 to vector<1x7xf32>
    %118 = arith.divf %116, %117 : vector<1x7xf32>
    %119 = vector.broadcast %118 : vector<1x7xf32> to vector<8x7xf32>
    %120 = arith.subf %114, %119 : vector<8x7xf32>
    %121 = arith.mulf %120, %120 : vector<8x7xf32>
    %cst_40 = arith.constant dense<0.000000e+00> : vector<7xf32>
    %122 = vector.multi_reduction <add>, %121, %cst_40 [0] : vector<8x7xf32> to vector<7xf32>
    %123 = vector.shape_cast %122 : vector<7xf32> to vector<1x7xf32>
    %cst_41 = arith.constant 8.000000e+00 : f32
    %124 = vector.broadcast %cst_41 : f32 to vector<1x7xf32>
    %125 = arith.divf %123, %124 : vector<1x7xf32>
    %cst_42 = arith.constant 9.99999974E-6 : f32
    %126 = vector.broadcast %cst_42 : f32 to vector<1x7xf32>
    %127 = arith.addf %125, %126 : vector<1x7xf32>
    %128 = math.rsqrt %127 : vector<1x7xf32>
    %129 = vector.broadcast %128 : vector<1x7xf32> to vector<8x7xf32>
    %130 = arith.mulf %120, %129 : vector<8x7xf32>
    %131 = vector.broadcast %1 : vector<1x7xf32> to vector<8x7xf32>
    %132 = arith.mulf %130, %131 : vector<8x7xf32>
    %133 = vector.broadcast %2 : vector<1x7xf32> to vector<8x7xf32>
    %134 = arith.addf %132, %133 : vector<8x7xf32>
    %cst_43 = arith.constant dense<0.000000e+00> : vector<8x32xf32>
    %135 = tpu.matmul %134, %7, %cst_43 {dimension_numbers = #tpu.dot_dimension_numbers<[1], [0], [0], [1], [0, 0, 1, 1], [], []>} : vector<8x7xf32>, vector<7x32xf32>, vector<8x32xf32> -> vector<8x32xf32>
    %136 = vector.broadcast %3 : vector<1x32xf32> to vector<8x32xf32>
    %137 = arith.addf %135, %136 : vector<8x32xf32>
    %cst_44 = arith.constant 0.000000e+00 : f32
    %138 = vector.broadcast %cst_44 : f32 to vector<8x32xf32>
    %139 = arith.maximumf %137, %138 : vector<8x32xf32>
    %cst_45 = arith.constant dense<0.000000e+00> : vector<32xf32>
    %140 = vector.multi_reduction <add>, %139, %cst_45 [0] : vector<8x32xf32> to vector<32xf32>
    %141 = vector.shape_cast %140 : vector<32xf32> to vector<1x32xf32>
    %cst_46 = arith.constant 8.000000e+00 : f32
    %142 = vector.broadcast %cst_46 : f32 to vector<1x32xf32>
    %143 = arith.divf %141, %142 : vector<1x32xf32>
    %144 = vector.broadcast %143 : vector<1x32xf32> to vector<8x32xf32>
    %145 = arith.subf %139, %144 : vector<8x32xf32>
    %146 = arith.mulf %145, %145 : vector<8x32xf32>
    %cst_47 = arith.constant dense<0.000000e+00> : vector<32xf32>
    %147 = vector.multi_reduction <add>, %146, %cst_47 [0] : vector<8x32xf32> to vector<32xf32>
    %148 = vector.shape_cast %147 : vector<32xf32> to vector<1x32xf32>
    %cst_48 = arith.constant 8.000000e+00 : f32
    %149 = vector.broadcast %cst_48 : f32 to vector<1x32xf32>
    %150 = arith.divf %148, %149 : vector<1x32xf32>
    %cst_49 = arith.constant 9.99999974E-6 : f32
    %151 = vector.broadcast %cst_49 : f32 to vector<1x32xf32>
    %152 = arith.addf %150, %151 : vector<1x32xf32>
    %153 = math.rsqrt %152 : vector<1x32xf32>
    %154 = vector.broadcast %153 : vector<1x32xf32> to vector<8x32xf32>
    %155 = arith.mulf %145, %154 : vector<8x32xf32>
    %156 = vector.broadcast %4 : vector<1x32xf32> to vector<8x32xf32>
    %157 = arith.mulf %155, %156 : vector<8x32xf32>
    %158 = vector.broadcast %5 : vector<1x32xf32> to vector<8x32xf32>
    %159 = arith.addf %157, %158 : vector<8x32xf32>
    %cst_50 = arith.constant dense<0.000000e+00> : vector<8x23xf32>
    %160 = tpu.matmul %114, %9, %cst_50 {dimension_numbers = #tpu.dot_dimension_numbers<[1], [0], [0], [1], [0, 0, 1, 1], [], []>} : vector<8x7xf32>, vector<7x23xf32>, vector<8x23xf32> -> vector<8x23xf32>
    %cst_51 = arith.constant dense<0.000000e+00> : vector<8x23xf32>
    %161 = tpu.matmul %159, %8, %cst_51 {dimension_numbers = #tpu.dot_dimension_numbers<[1], [0], [0], [1], [0, 0, 1, 1], [], []>} : vector<8x32xf32>, vector<32x23xf32>, vector<8x23xf32> -> vector<8x23xf32>
    %162 = arith.addf %160, %161 : vector<8x23xf32>
    %163 = vector.broadcast %6 : vector<1x23xf32> to vector<8x23xf32>
    %164 = arith.addf %162, %163 : vector<8x23xf32>
    %c0_52 = arith.constant 0 : index
    %c0_53 = arith.constant 0 : index
    %165 = vector.load %arg7[%c0_52, %c0_53] : memref<8x23xf32, #tpu.memory_space<vmem>>, vector<8x23xf32>
    tpu.vector_store %arg7[%c0_52, %c0_53], %164 {strides = array<i32>} : memref<8x23xf32, #tpu.memory_space<vmem>>, vector<8x23xf32>,
    return
  }
  func.func @transform_0(%arg0: i32) -> (i32, i32) {
    %c0_i32 = arith.constant 0 : i32
    %c0_i32_0 = arith.constant 0 : i32
    %c0_i32_1 = arith.constant 0 : i32
    return %c0_i32, %c0_i32_0 : i32, i32
  }
  func.func @transform_1(%arg0: i32) -> (i32, i32) {
    %c0_i32 = arith.constant 0 : i32
    %c0_i32_0 = arith.constant 0 : i32
    %c0_i32_1 = arith.constant 0 : i32
    return %c0_i32, %c0_i32_0 : i32, i32
  }
  func.func @transform_2(%arg0: i32) -> (i32, i32) {
    %c0_i32 = arith.constant 0 : i32
    %c0_i32_0 = arith.constant 0 : i32
    %c0_i32_1 = arith.constant 0 : i32
    return %c0_i32, %c0_i32_0 : i32, i32
  }
  func.func @transform_3(%arg0: i32) -> (i32, i32) {
    %c0_i32 = arith.constant 0 : i32
    %c0_i32_0 = arith.constant 0 : i32
    %c0_i32_1 = arith.constant 0 : i32
    return %c0_i32, %c0_i32_0 : i32, i32
  }
  func.func @transform_4(%arg0: i32) -> (i32, i32) {
    %c0_i32 = arith.constant 0 : i32
    %c0_i32_0 = arith.constant 0 : i32
    %c0_i32_1 = arith.constant 0 : i32
    return %c0_i32, %c0_i32_0 : i32, i32
  }
  func.func @transform_5(%arg0: i32) -> (i32, i32) {
    %c0_i32 = arith.constant 0 : i32
    %c0_i32_0 = arith.constant 0 : i32
    %c0_i32_1 = arith.constant 0 : i32
    return %c0_i32, %c0_i32_0 : i32, i32
  }
  func.func @transform_6(%arg0: i32) -> (i32, i32) {
    %c0_i32 = arith.constant 0 : i32
    %c0_i32_0 = arith.constant 0 : i32
    %c0_i32_1 = arith.constant 0 : i32
    return %c0_i32, %c0_i32_0 : i32, i32
  }
}

</mosaic_0001>

<llo_original>
// kernel: triplet_net_bn2.1
$region0: #{triplet_net_bn2.1}
  #allocation0 [shape = 'u32[]', space=smem, size = 0x4, offset = 0x4, fixed_abs, tag = 'smem constant byte address 0x4 - core index']
  #allocation1 [shape = 'u32[144,128]{1,0:T(1,128)}', space=vmem, size = 0x12000, scoped, tag = 'internal scratch']
  %s0 = inlined_call_operand.hbm [shape: f32[8,7], index: 0, kind: input, shape index: {}]
  %s1 = inlined_call_operand.hbm [shape: f32[8,7], index: 1, kind: input, shape index: {}]
  %s2 = inlined_call_operand.hbm [shape: f32[8,7], index: 2, kind: input, shape index: {}]
  %s3 = inlined_call_operand.hbm [shape: f32[56,128], index: 3, kind: input, shape index: {}]
  %s4 = inlined_call_operand.hbm [shape: f32[8,23], index: 4, kind: output, shape index: {0}]
  %s5 = inlined_call_operand.hbm [shape: f32[8,23], index: 5, kind: output, shape index: {1}]
  %s6 = inlined_call_operand.hbm [shape: f32[8,23], index: 6, kind: output, shape index: {2}]
  %7 = xla_tuple %s4, %s5, %s6
  %s8 = sld [smem:[#allocation0]]
  $region58: #{triplet_net_bn2.1} parent=0
    _
  %s10 = ssub.s32 1, %s8
  %s11 = scalar_select 0, %s10, %s8
  $region1: #{triplet_net_bn2.1} parent=0
    #allocation2 [shape = 'u8[4096]{0}', space=vmem, size = 0x1000, scoped, tag = 'input window, operand 0, single buffered']
    #allocation3 [shape = 's32[1]{0}', space=sflag, size = 0x4, scoped, tag = 'scoped memory for triplet_net_bn2.1']
    #allocation4 [shape = 's32[1]{0}', space=sflag, size = 0x4, scoped, tag = 'scoped memory for triplet_net_bn2.1']
    #allocation5 [shape = 'u8[4096]{0}', space=vmem, size = 0x1000, scoped, tag = 'input window, operand 1, single buffered']
    #allocation6 [shape = 's32[1]{0}', space=sflag, size = 0x4, scoped, tag = 'scoped memory for triplet_net_bn2.1']
    #allocation7 [shape = 'u8[4096]{0}', space=vmem, size = 0x1000, scoped, tag = 'input window, operand 2, single buffered']
    #allocation8 [shape = 'u8[28672]{0}', space=vmem, size = 0x7000, scoped, tag = 'input window, operand 3, single buffered']
    #allocation9 [shape = 's32[1]{0}', space=sflag, size = 0x4, scoped, tag = 'scoped memory for triplet_net_bn2.1']
    #allocation10 [shape = 'u8[4096]{0}', space=vmem, size = 0x1000, scoped, tag = 'output window, operand 0, single buffered']
    #allocation11 [shape = 'u8[4096]{0}', space=vmem, size = 0x1000, scoped, tag = 'output window, operand 1, single buffered']
    #allocation12 [shape = 's32[1]{0}', space=sflag, size = 0x4, scoped, tag = 'scoped memory for triplet_net_bn2.1']
    #allocation13 [shape = 'u8[4096]{0}', space=vmem, size = 0x1000, scoped, tag = 'output window, operand 2, single buffered']
    %12 = vsyncpa [#allocation3], 0
    %13 = vsyncpa [#allocation6], 0
    %14 = vsyncpa [#allocation9], 0
    %15 = vsyncpa [#allocation4], 0
    %16 = vsyncpa [#allocation12], 0
    // Predicated region
    $region2: #{triplet_net_bn2.1} parent=1 // pred_check
      _
    $region3: #{triplet_net_bn2.1} parent=1 // pred_check_branch
      %18 = sbr.rel (0) target = $region5
    $region4: #{triplet_net_bn2.1} parent=1 // pred_region
      %s20 = ssub.s32 128, 128
      %21 = vsyncadd [#allocation3], %s20
      %s23 = sshll.u32 [#allocation2], 4
      %s24 = int_to_ptr.vmem [resolvable:$true] %s23
      %26 = dma.hbm_to_vmem [thread:$0]  %s0, 128, %s24, [#allocation3]
    $region5: #{triplet_net_bn2.1} parent=1 // pred_fallthru
      _
    // Predicated region
    $region6: #{triplet_net_bn2.1} parent=1 // pred_check
      _
    $region7: #{triplet_net_bn2.1} parent=1 // pred_check_branch
      %28 = sbr.rel (0) target = $region9
    $region8: #{triplet_net_bn2.1} parent=1 // pred_region
      %s30 = ssub.s32 128, 128
      %31 = vsyncadd [#allocation6], %s30
      %s33 = sshll.u32 [#allocation5], 4
      %s34 = int_to_ptr.vmem [resolvable:$true] %s33
      %36 = dma.hbm_to_vmem [thread:$0]  %s1, 128, %s34, [#allocation6]
    $region9: #{triplet_net_bn2.1} parent=1 // pred_fallthru
      _
    // Predicated region
    $region10: #{triplet_net_bn2.1} parent=1 // pred_check
      _
    $region11: #{triplet_net_bn2.1} parent=1 // pred_check_branch
      %38 = sbr.rel (0) target = $region13
    $region12: #{triplet_net_bn2.1} parent=1 // pred_region
      %s40 = ssub.s32 128, 128
      %41 = vsyncadd [#allocation6], %s40
      %s43 = sshll.u32 [#allocation7], 4
      %s44 = int_to_ptr.vmem [resolvable:$true] %s43
      %46 = dma.hbm_to_vmem [thread:$0]  %s2, 128, %s44, [#allocation6]
    $region13: #{triplet_net_bn2.1} parent=1 // pred_fallthru
      _
    // Predicated region
    $region14: #{triplet_net_bn2.1} parent=1 // pred_check
      _
    $region15: #{triplet_net_bn2.1} parent=1 // pred_check_branch
      %48 = sbr.rel (0) target = $region17
    $region16: #{triplet_net_bn2.1} parent=1 // pred_region
      %s50 = ssub.s32 896, 896
      %51 = vsyncadd [#allocation9], %s50
      %s52 = sshll.u32 [#allocation8], 4
      %s53 = int_to_ptr.vmem [resolvable:$true] %s52
      %58 = dma.hbm_to_vmem [thread:$0]  %s3, 896, %s53, [#allocation9], 128, 128, 8
    $region17: #{triplet_net_bn2.1} parent=1 // pred_fallthru
      _
    // Predicated region
    $region18: #{triplet_net_bn2.1} parent=1 // pred_check
      _
    $region19: #{triplet_net_bn2.1} parent=1 // pred_check_branch
      %60 = sbr.rel (0) target = $region21
    $region20: #{triplet_net_bn2.1} parent=1 // pred_region
      %61 = dma.done [#allocation3], 128
    $region21: #{triplet_net_bn2.1} parent=1 // pred_fallthru
      _
    // Predicated region
    $region22: #{triplet_net_bn2.1} parent=1 // pred_check
      _
    $region23: #{triplet_net_bn2.1} parent=1 // pred_check_branch
      %63 = sbr.rel (0) target = $region25
    $region24: #{triplet_net_bn2.1} parent=1 // pred_region
      %64 = dma.done [#allocation6], 128
    $region25: #{triplet_net_bn2.1} parent=1 // pred_fallthru
      _
    // Predicated region
    $region26: #{triplet_net_bn2.1} parent=1 // pred_check
      _
    $region27: #{triplet_net_bn2.1} parent=1 // pred_check_branch
      %66 = sbr.rel (0) target = $region29
    $region28: #{triplet_net_bn2.1} parent=1 // pred_region
      %67 = dma.done [#allocation6], 128
    $region29: #{triplet_net_bn2.1} parent=1 // pred_fallthru
      _
    // Predicated region
    $region30: #{triplet_net_bn2.1} parent=1 // pred_check
      _
    $region31: #{triplet_net_bn2.1} parent=1 // pred_check_branch
      %69 = sbr.rel (0) target = $region33
    $region32: #{triplet_net_bn2.1} parent=1 // pred_region
      %70 = dma.done [#allocation9], 896
    $region33: #{triplet_net_bn2.1} parent=1 // pred_fallthru
      _
    %v71 = vld [vmem:[#allocation8] sm:$0xff]
    %v72 = vld [vmem:[#allocation8 + $0x8] sm:$0xff]
    %v73 = vld [vmem:[#allocation8 + $0x10] sm:$0xff]
    %v74 = vld [vmem:[#allocation8 + $0x18] sm:$0xff]
    %v75 = vld [vmem:[#allocation8 + $0x20] sm:$0xff]
    %v76 = vld [vmem:[#allocation8 + $0x28] sm:$0xff]
    %v77 = vld [vmem:[#allocation8 + $0x30] sm:$0xff]
    %v78 = vld [vmem:[#allocation2] sm:$0xff]
    %vm79 = vcmask 56320
    %v80 = vsel %vm79, %v78, 0.0
    %v81 = vrot.slane %v80, 4
    %v82 = vadd.f32 %v80, %v81
    %v83 = vrot.slane %v82, 2
    %v84 = vadd.f32 %v82, %v83
    %v85 = vrot.slane %v84, 1
    %v86 = vadd.f32 %v84, %v85
    %v87 = vrcp.pop 8.0
    %v88 = vmul.f32 %v86, %v87
    %v89 = vsub.f32 %v78, %v88
    %v90 = vmul.f32 %v89, %v89
    %v91 = vsel %vm79, %v90, 0.0
    %v92 = vrot.slane %v91, 4
    %v93 = vadd.f32 %v91, %v92
    %v94 = vrot.slane %v93, 2
    %v95 = vadd.f32 %v93, %v94
    %v96 = vrot.slane %v95, 1
    %v97 = vadd.f32 %v95, %v96
    %v98 = vmul.f32 %v97, %v87
    %v99 = vadd.f32 %v98, 1e-05
    %v100 = vrsqrt.pop %v99
    %v101 = vmul.f32 %v89, %v100
    %v102 = vlaneseq
    %v103 = vshrl.u32 %v102, 7
    %v104 = vsub.s32 0, %v103
    %v105 = vrot.slane %v71, %v104
    %v106 = vmul.f32 %v101, %v105
    %v107 = vlaneseq
    %v108 = vshrl.u32 %v107, 7
    %v109 = vsub.s32 1, %v108
    %v110 = vrot.slane %v71, %v109
    %v111 = vadd.f32 %v106, %v110
    %v112 = vlaneseq
    %v113 = vshrl.u32 %v112, 7
    %v114 = vsub.s32 2, %v113
    %v115 = vrot.slane %v71, %v114
    %v117 = vsel %vm79, %v111, 0
    %vm119 = vcmask 1046528
    %v121 = vsel %vm119, %v72, 0
    %123 = vmatprep.subr.mxu0 0.0
    %124 = vmatpush1.msra.mxu0 %v121
    %125 = vmatprep.subr.mxu0 0.0
    %126 = vmatpush1.msra.mxu0 0.0
    %127 = vmatprep.subr.mxu0 0.0
    %128 = vmatpush1.msra.mxu0 0.0
    %129 = vmatprep.subr.mxu0 0.0
    %130 = vmatpush1.msra.mxu0 0.0
    %131 = vmatprep.subr.mxu0 0.0
    %132 = vmatpush1.msra.mxu0 0.0
    %133 = vmatprep.subr.mxu0 0.0
    %134 = vmatpush1.msra.mxu0 0.0
    %135 = vmatprep.subr.mxu0 0.0
    %136 = vmatpush1.msra.mxu0 0.0
    %137 = vmatprep.subr.mxu0 0.0
    %138 = vmatpush1.msra.mxu0 0.0
    %139 = vmatprep.subr.mxu0 0.0
    %140 = vmatpush1.msra.mxu0 0.0
    %141 = vmatprep.subr.mxu0 0.0
    %142 = vmatpush1.msra.mxu0 0.0
    %143 = vmatprep.subr.mxu0 0.0
    %144 = vmatpush1.msra.mxu0 0.0
    %145 = vmatprep.subr.mxu0 0.0
    %146 = vmatpush1.msra.mxu0 0.0
    %147 = vmatprep.subr.mxu0 0.0
    %148 = vmatpush1.msra.mxu0 0.0
    %149 = vmatprep.subr.mxu0 0.0
    %150 = vmatpush1.msra.mxu0 0.0
    %151 = vmatprep.subr.mxu0 0.0
    %152 = vmatpush1.msra.mxu0 0.0
    %153 = vmatprep.subr.mxu0 0.0
    %154 = vmatpush1.msra.mxu0 0.0
    %155 = vmatprep.subr.mxu0 0.0
    %156 = vmatpush1.msra.mxu0 0.0
    %157 = vmatprep.subr.mxu0 0.0
    %158 = vmatpush1.msra.mxu0 0.0
    %159 = vmatprep.subr.mxu0 0.0
    %160 = vmatpush1.msra.mxu0 0.0
    %161 = vmatprep.subr.mxu0 0.0
    %162 = vmatpush1.msra.mxu0 0.0
    %163 = vmatprep.subr.mxu0 0.0
    %164 = vmatpush1.msra.mxu0 0.0
    %165 = vmatprep.subr.mxu0 0.0
    %166 = vmatpush1.msra.mxu0 0.0
    %167 = vmatprep.subr.mxu0 0.0
    %168 = vmatpush1.msra.mxu0 0.0
    %169 = vmatprep.subr.mxu0 0.0
    %170 = vmatpush1.msra.mxu0 0.0
    %171 = vmatprep.subr.mxu0 0.0
    %172 = vmatpush1.msra.mxu0 0.0
    %173 = vmatprep.subr.mxu0 0.0
    %174 = vmatpush1.msra.mxu0 0.0
    %175 = vmatprep.subr.mxu0 0.0
    %176 = vmatpush1.msra.mxu0 0.0
    %177 = vmatprep.subr.mxu0 0.0
    %178 = vmatpush1.msra.mxu0 0.0
    %179 = vmatprep.subr.mxu0 0.0
    %180 = vmatpush1.msra.mxu0 0.0
    %181 = vmatprep.subr.mxu0 0.0
    %182 = vmatpush1.msra.mxu0 0.0
    %183 = vmatprep.subr.mxu0 0.0
    %184 = vmatpush1.msra.mxu0 0.0
    %185 = vmatprep.subr.mxu0 0.0
    %186 = vmatpush1.msra.mxu0 0.0
    %187 = vmatprep.mubr.f32.mxu0 0.0
    %188 = vmatmul.mubr.f32.gmra.mrb[0].mxu0 %v117
    %v189 = vpop.f32.mrb[0].mxu0
    %v190 = vadd.f32 %v115, %v189
    %v191 = vpop.f32.mrb[0].mxu0
    %192 = vdwg.mxu0
    %v193 = vmax.f32 %v190, 0.0
    %vm194 = vcmask 261120
    %v195 = vsel %vm194, %v193, 0.0
    %v196 = vrot.slane %v195, 4
    %v197 = vadd.f32 %v195, %v196
    %v198 = vrot.slane %v197, 2
    %v199 = vadd.f32 %v197, %v198
    %v200 = vrot.slane %v199, 1
    %v201 = vadd.f32 %v199, %v200
    %v202 = vmul.f32 %v201, %v87
    %v203 = vsub.f32 %v193, %v202
    %v204 = vmul.f32 %v203, %v203
    %v205 = vsel %vm194, %v204, 0.0
    %v206 = vrot.slane %v205, 4
    %v207 = vadd.f32 %v205, %v206
    %v208 = vrot.slane %v207, 2
    %v209 = vadd.f32 %v207, %v208
    %v210 = vrot.slane %v209, 1
    %v211 = vadd.f32 %v209, %v210
    %v212 = vmul.f32 %v211, %v87
    %v213 = vadd.f32 %v212, 1e-05
    %v214 = vrsqrt.pop %v213
    %v215 = vmul.f32 %v203, %v214
    %v216 = vlaneseq
    %v217 = vshrl.u32 %v216, 7
    %v218 = vsub.s32 3, %v217
    %v219 = vrot.slane %v71, %v218
    %v220 = vmul.f32 %v215, %v219
    %v221 = vlaneseq
    %v222 = vshrl.u32 %v221, 7
    %v223 = vsub.s32 4, %v222
    %v224 = vrot.slane %v71, %v223
    %v225 = vadd.f32 %v220, %v224
    %v227 = vsel %vm194, %v225, 0
    %229 = vmatprep.subr.mxu0 0.0
    %230 = vmatpush1.msra.mxu0 %v73
    %231 = vmatprep.subr.mxu0 0.0
    %232 = vmatpush1.msra.mxu0 %v74
    %233 = vmatprep.subr.mxu0 0.0
    %234 = vmatpush1.msra.mxu0 %v75
    %235 = vmatprep.subr.mxu0 0.0
    %236 = vmatpush1.msra.mxu0 %v76
    %237 = vmatprep.subr.mxu0 0.0
    %238 = vmatpush1.msra.mxu0 0.0
    %239 = vmatprep.subr.mxu0 0.0
    %240 = vmatpush1.msra.mxu0 0.0
    %241 = vmatprep.subr.mxu0 0.0
    %242 = vmatpush1.msra.mxu0 0.0
    %243 = vmatprep.subr.mxu0 0.0
    %244 = vmatpush1.msra.mxu0 0.0
    %245 = vmatprep.subr.mxu0 0.0
    %246 = vmatpush1.msra.mxu0 0.0
    %247 = vmatprep.subr.mxu0 0.0
    %248 = vmatpush1.msra.mxu0 0.0
    %249 = vmatprep.subr.mxu0 0.0
    %250 = vmatpush1.msra.mxu0 0.0
    %251 = vmatprep.subr.mxu0 0.0
    %252 = vmatpush1.msra.mxu0 0.0
    %253 = vmatprep.subr.mxu0 0.0
    %254 = vmatpush1.msra.mxu0 0.0
    %255 = vmatprep.subr.mxu0 0.0
    %256 = vmatpush1.msra.mxu0 0.0
    %257 = vmatprep.subr.mxu0 0.0
    %258 = vmatpush1.msra.mxu0 0.0
    %259 = vmatprep.subr.mxu0 0.0
    %260 = vmatpush1.msra.mxu0 0.0
    %261 = vmatprep.subr.mxu0 0.0
    %262 = vmatpush1.msra.mxu0 0.0
    %263 = vmatprep.subr.mxu0 0.0
    %264 = vmatpush1.msra.mxu0 0.0
    %265 = vmatprep.subr.mxu0 0.0
    %266 = vmatpush1.msra.mxu0 0.0
    %267 = vmatprep.subr.mxu0 0.0
    %268 = vmatpush1.msra.mxu0 0.0
    %269 = vmatprep.subr.mxu0 0.0
    %270 = vmatpush1.msra.mxu0 0.0
    %271 = vmatprep.subr.mxu0 0.0
    %272 = vmatpush1.msra.mxu0 0.0
    %273 = vmatprep.subr.mxu0 0.0
    %274 = vmatpush1.msra.mxu0 0.0
    %275 = vmatprep.subr.mxu0 0.0
    %276 = vmatpush1.msra.mxu0 0.0
    %277 = vmatprep.subr.mxu0 0.0
    %278 = vmatpush1.msra.mxu0 0.0
    %279 = vmatprep.subr.mxu0 0.0
    %280 = vmatpush1.msra.mxu0 0.0
    %281 = vmatprep.subr.mxu0 0.0
    %282 = vmatpush1.msra.mxu0 0.0
    %283 = vmatprep.subr.mxu0 0.0
    %284 = vmatpush1.msra.mxu0 0.0
    %285 = vmatprep.subr.mxu0 0.0
    %286 = vmatpush1.msra.mxu0 0.0
    %287 = vmatprep.subr.mxu0 0.0
    %288 = vmatpush1.msra.mxu0 0.0
    %289 = vmatprep.subr.mxu0 0.0
    %290 = vmatpush1.msra.mxu0 0.0
    %291 = vmatprep.subr.mxu0 0.0
    %292 = vmatpush1.msra.mxu0 0.0
    %293 = vmatprep.mubr.f32.mxu0 0.0
    %294 = vmatmul.mubr.f32.gmra.mrb[0].mxu0 %v227
    %v295 = vpop.f32.mrb[0].mxu0
    %v296 = vadd.f32 0.0, %v295
    %v297 = vpop.f32.mrb[0].mxu0
    %298 = vdwg.mxu0
    %v300 = vsel %vm79, %v78, 0
    %v303 = vsel %vm119, %v77, 0
    %305 = vmatprep.subr.mxu0 0.0
    %306 = vmatpush1.msra.mxu0 %v303
    %307 = vmatprep.subr.mxu0 0.0
    %308 = vmatpush1.msra.mxu0 0.0
    %309 = vmatprep.subr.mxu0 0.0
    %310 = vmatpush1.msra.mxu0 0.0
    %311 = vmatprep.subr.mxu0 0.0
    %312 = vmatpush1.msra.mxu0 0.0
    %313 = vmatprep.subr.mxu0 0.0
    %314 = vmatpush1.msra.mxu0 0.0
    %315 = vmatprep.subr.mxu0 0.0
    %316 = vmatpush1.msra.mxu0 0.0
    %317 = vmatprep.subr.mxu0 0.0
    %318 = vmatpush1.msra.mxu0 0.0
    %319 = vmatprep.subr.mxu0 0.0
    %320 = vmatpush1.msra.mxu0 0.0
    %321 = vmatprep.subr.mxu0 0.0
    %322 = vmatpush1.msra.mxu0 0.0
    %323 = vmatprep.subr.mxu0 0.0
    %324 = vmatpush1.msra.mxu0 0.0
    %325 = vmatprep.subr.mxu0 0.0
    %326 = vmatpush1.msra.mxu0 0.0
    %327 = vmatprep.subr.mxu0 0.0
    %328 = vmatpush1.msra.mxu0 0.0
    %329 = vmatprep.subr.mxu0 0.0
    %330 = vmatpush1.msra.mxu0 0.0
    %331 = vmatprep.subr.mxu0 0.0
    %332 = vmatpush1.msra.mxu0 0.0
    %333 = vmatprep.subr.mxu0 0.0
    %334 = vmatpush1.msra.mxu0 0.0
    %335 = vmatprep.subr.mxu0 0.0
    %336 = vmatpush1.msra.mxu0 0.0
    %337 = vmatprep.subr.mxu0 0.0
    %338 = vmatpush1.msra.mxu0 0.0
    %339 = vmatprep.subr.mxu0 0.0
    %340 = vmatpush1.msra.mxu0 0.0
    %341 = vmatprep.subr.mxu0 0.0
    %342 = vmatpush1.msra.mxu0 0.0
    %343 = vmatprep.subr.mxu0 0.0
    %344 = vmatpush1.msra.mxu0 0.0
    %345 = vmatprep.subr.mxu0 0.0
    %346 = vmatpush1.msra.mxu0 0.0
    %347 = vmatprep.subr.mxu0 0.0
    %348 = vmatpush1.msra.mxu0 0.0
    %349 = vmatprep.subr.mxu0 0.0
    %350 = vmatpush1.msra.mxu0 0.0
    %351 = vmatprep.subr.mxu0 0.0
    %352 = vmatpush1.msra.mxu0 0.0
    %353 = vmatprep.subr.mxu0 0.0
    %354 = vmatpush1.msra.mxu0 0.0
    %355 = vmatprep.subr.mxu0 0.0
    %356 = vmatpush1.msra.mxu0 0.0
    %357 = vmatprep.subr.mxu0 0.0
    %358 = vmatpush1.msra.mxu0 0.0
    %359 = vmatprep.subr.mxu0 0.0
    %360 = vmatpush1.msra.mxu0 0.0
    %361 = vmatprep.subr.mxu0 0.0
    %362 = vmatpush1.msra.mxu0 0.0
    %363 = vmatprep.subr.mxu0 0.0
    %364 = vmatpush1.msra.mxu0 0.0
    %365 = vmatprep.subr.mxu0 0.0
    %366 = vmatpush1.msra.mxu0 0.0
    %367 = vmatprep.subr.mxu0 0.0
    %368 = vmatpush1.msra.mxu0 0.0
    %369 = vmatprep.mubr.f32.mxu0 0.0
    %370 = vmatmul.mubr.f32.gmra.mrb[0].mxu0 %v300
    %v371 = vpop.f32.mrb[0].mxu0
    %v372 = vadd.f32 %v296, %v371
    %v373 = vpop.f32.mrb[0].mxu0
    %374 = vdwg.mxu0
    %v375 = vlaneseq
    %v376 = vshrl.u32 %v375, 7
    %v377 = vsub.s32 5, %v376
    %v378 = vrot.slane %v71, %v377
    %v379 = vadd.f32 %v372, %v378
    %vm380 = vcmask 187392
    %381 = vst.msk [vmem:[#allocation10] sm:$0xff] %vm380, %v379
    %v382 = vld [vmem:[#allocation5] sm:$0xff]
    %v383 = vsel %vm79, %v382, 0.0
    %v384 = vrot.slane %v383, 4
    %v385 = vadd.f32 %v383, %v384
    %v386 = vrot.slane %v385, 2
    %v387 = vadd.f32 %v385, %v386
    %v388 = vrot.slane %v387, 1
    %v389 = vadd.f32 %v387, %v388
    %v390 = vmul.f32 %v389, %v87
    %v391 = vsub.f32 %v382, %v390
    %v392 = vmul.f32 %v391, %v391
    %v393 = vsel %vm79, %v392, 0.0
    %v394 = vrot.slane %v393, 4
    %v395 = vadd.f32 %v393, %v394
    %v396 = vrot.slane %v395, 2
    %v397 = vadd.f32 %v395, %v396
    %v398 = vrot.slane %v397, 1
    %v399 = vadd.f32 %v397, %v398
    %v400 = vmul.f32 %v399, %v87
    %v401 = vadd.f32 %v400, 1e-05
    %v402 = vrsqrt.pop %v401
    %v403 = vmul.f32 %v391, %v402
    %v404 = vmul.f32 %v403, %v105
    %v405 = vadd.f32 %v404, %v110
    %v407 = vsel %vm79, %v405, 0
    %409 = vmatprep.subr.mxu0 0.0
    %410 = vmatpush1.msra.mxu0 %v121
    %411 = vmatprep.subr.mxu0 0.0
    %412 = vmatpush1.msra.mxu0 0.0
    %413 = vmatprep.subr.mxu0 0.0
    %414 = vmatpush1.msra.mxu0 0.0
    %415 = vmatprep.subr.mxu0 0.0
    %416 = vmatpush1.msra.mxu0 0.0
    %417 = vmatprep.subr.mxu0 0.0
    %418 = vmatpush1.msra.mxu0 0.0
    %419 = vmatprep.subr.mxu0 0.0
    %420 = vmatpush1.msra.mxu0 0.0
    %421 = vmatprep.subr.mxu0 0.0
    %422 = vmatpush1.msra.mxu0 0.0
    %423 = vmatprep.subr.mxu0 0.0
    %424 = vmatpush1.msra.mxu0 0.0
    %425 = vmatprep.subr.mxu0 0.0
    %426 = vmatpush1.msra.mxu0 0.0
    %427 = vmatprep.subr.mxu0 0.0
    %428 = vmatpush1.msra.mxu0 0.0
    %429 = vmatprep.subr.mxu0 0.0
    %430 = vmatpush1.msra.mxu0 0.0
    %431 = vmatprep.subr.mxu0 0.0
    %432 = vmatpush1.msra.mxu0 0.0
    %433 = vmatprep.subr.mxu0 0.0
    %434 = vmatpush1.msra.mxu0 0.0
    %435 = vmatprep.subr.mxu0 0.0
    %436 = vmatpush1.msra.mxu0 0.0
    %437 = vmatprep.subr.mxu0 0.0
    %438 = vmatpush1.msra.mxu0 0.0
    %439 = vmatprep.subr.mxu0 0.0
    %440 = vmatpush1.msra.mxu0 0.0
    %441 = vmatprep.subr.mxu0 0.0
    %442 = vmatpush1.msra.mxu0 0.0
    %443 = vmatprep.subr.mxu0 0.0
    %444 = vmatpush1.msra.mxu0 0.0
    %445 = vmatprep.subr.mxu0 0.0
    %446 = vmatpush1.msra.mxu0 0.0
    %447 = vmatprep.subr.mxu0 0.0
    %448 = vmatpush1.msra.mxu0 0.0
    %449 = vmatprep.subr.mxu0 0.0
    %450 = vmatpush1.msra.mxu0 0.0
    %451 = vmatprep.subr.mxu0 0.0
    %452 = vmatpush1.msra.mxu0 0.0
    %453 = vmatprep.subr.mxu0 0.0
    %454 = vmatpush1.msra.mxu0 0.0
    %455 = vmatprep.subr.mxu0 0.0
    %456 = vmatpush1.msra.mxu0 0.0
    %457 = vmatprep.subr.mxu0 0.0
    %458 = vmatpush1.msra.mxu0 0.0
    %459 = vmatprep.subr.mxu0 0.0
    %460 = vmatpush1.msra.mxu0 0.0
    %461 = vmatprep.subr.mxu0 0.0
    %462 = vmatpush1.msra.mxu0 0.0
    %463 = vmatprep.subr.mxu0 0.0
    %464 = vmatpush1.msra.mxu0 0.0
    %465 = vmatprep.subr.mxu0 0.0
    %466 = vmatpush1.msra.mxu0 0.0
    %467 = vmatprep.subr.mxu0 0.0
    %468 = vmatpush1.msra.mxu0 0.0
    %469 = vmatprep.subr.mxu0 0.0
    %470 = vmatpush1.msra.mxu0 0.0
    %471 = vmatprep.subr.mxu0 0.0
    %472 = vmatpush1.msra.mxu0 0.0
    %473 = vmatprep.mubr.f32.mxu0 0.0
    %474 = vmatmul.mubr.f32.gmra.mrb[0].mxu0 %v407
    %v475 = vpop.f32.mrb[0].mxu0
    %v476 = vadd.f32 %v115, %v475
    %v477 = vpop.f32.mrb[0].mxu0
    %478 = vdwg.mxu0
    %v479 = vmax.f32 %v476, 0.0
    %v480 = vsel %vm194, %v479, 0.0
    %v481 = vrot.slane %v480, 4
    %v482 = vadd.f32 %v480, %v481
    %v483 = vrot.slane %v482, 2
    %v484 = vadd.f32 %v482, %v483
    %v485 = vrot.slane %v484, 1
    %v486 = vadd.f32 %v484, %v485
    %v487 = vmul.f32 %v486, %v87
    %v488 = vsub.f32 %v479, %v487
    %v489 = vmul.f32 %v488, %v488
    %v490 = vsel %vm194, %v489, 0.0
    %v491 = vrot.slane %v490, 4
    %v492 = vadd.f32 %v490, %v491
    %v493 = vrot.slane %v492, 2
    %v494 = vadd.f32 %v492, %v493
    %v495 = vrot.slane %v494, 1
    %v496 = vadd.f32 %v494, %v495
    %v497 = vmul.f32 %v496, %v87
    %v498 = vadd.f32 %v497, 1e-05
    %v499 = vrsqrt.pop %v498
    %v500 = vmul.f32 %v488, %v499
    %v501 = vmul.f32 %v500, %v219
    %v502 = vadd.f32 %v501, %v224
    %v504 = vsel %vm194, %v502, 0
    %506 = vmatprep.subr.mxu0 0.0
    %507 = vmatpush1.msra.mxu0 %v73
    %508 = vmatprep.subr.mxu0 0.0
    %509 = vmatpush1.msra.mxu0 %v74
    %510 = vmatprep.subr.mxu0 0.0
    %511 = vmatpush1.msra.mxu0 %v75
    %512 = vmatprep.subr.mxu0 0.0
    %513 = vmatpush1.msra.mxu0 %v76
    %514 = vmatprep.subr.mxu0 0.0
    %515 = vmatpush1.msra.mxu0 0.0
    %516 = vmatprep.subr.mxu0 0.0
    %517 = vmatpush1.msra.mxu0 0.0
    %518 = vmatprep.subr.mxu0 0.0
    %519 = vmatpush1.msra.mxu0 0.0
    %520 = vmatprep.subr.mxu0 0.0
    %521 = vmatpush1.msra.mxu0 0.0
    %522 = vmatprep.subr.mxu0 0.0
    %523 = vmatpush1.msra.mxu0 0.0
    %524 = vmatprep.subr.mxu0 0.0
    %525 = vmatpush1.msra.mxu0 0.0
    %526 = vmatprep.subr.mxu0 0.0
    %527 = vmatpush1.msra.mxu0 0.0
    %528 = vmatprep.subr.mxu0 0.0
    %529 = vmatpush1.msra.mxu0 0.0
    %530 = vmatprep.subr.mxu0 0.0
    %531 = vmatpush1.msra.mxu0 0.0
    %532 = vmatprep.subr.mxu0 0.0
    %533 = vmatpush1.msra.mxu0 0.0
    %534 = vmatprep.subr.mxu0 0.0
    %535 = vmatpush1.msra.mxu0 0.0
    %536 = vmatprep.subr.mxu0 0.0
    %537 = vmatpush1.msra.mxu0 0.0
    %538 = vmatprep.subr.mxu0 0.0
    %539 = vmatpush1.msra.mxu0 0.0
    %540 = vmatprep.subr.mxu0 0.0
    %541 = vmatpush1.msra.mxu0 0.0
    %542 = vmatprep.subr.mxu0 0.0
    %543 = vmatpush1.msra.mxu0 0.0
    %544 = vmatprep.subr.mxu0 0.0
    %545 = vmatpush1.msra.mxu0 0.0
    %546 = vmatprep.subr.mxu0 0.0
    %547 = vmatpush1.msra.mxu0 0.0
    %548 = vmatprep.subr.mxu0 0.0
    %549 = vmatpush1.msra.mxu0 0.0
    %550 = vmatprep.subr.mxu0 0.0
    %551 = vmatpush1.msra.mxu0 0.0
    %552 = vmatprep.subr.mxu0 0.0
    %553 = vmatpush1.msra.mxu0 0.0
    %554 = vmatprep.subr.mxu0 0.0
    %555 = vmatpush1.msra.mxu0 0.0
    %556 = vmatprep.subr.mxu0 0.0
    %557 = vmatpush1.msra.mxu0 0.0
    %558 = vmatprep.subr.mxu0 0.0
    %559 = vmatpush1.msra.mxu0 0.0
    %560 = vmatprep.subr.mxu0 0.0
    %561 = vmatpush1.msra.mxu0 0.0
    %562 = vmatprep.subr.mxu0 0.0
    %563 = vmatpush1.msra.mxu0 0.0
    %564 = vmatprep.subr.mxu0 0.0
    %565 = vmatpush1.msra.mxu0 0.0
    %566 = vmatprep.subr.mxu0 0.0
    %567 = vmatpush1.msra.mxu0 0.0
    %568 = vmatprep.subr.mxu0 0.0
    %569 = vmatpush1.msra.mxu0 0.0
    %570 = vmatprep.mubr.f32.mxu0 0.0
    %571 = vmatmul.mubr.f32.gmra.mrb[0].mxu0 %v504
    %v572 = vpop.f32.mrb[0].mxu0
    %v573 = vadd.f32 0.0, %v572
    %v574 = vpop.f32.mrb[0].mxu0
    %575 = vdwg.mxu0
    %v577 = vsel %vm79, %v382, 0
    %579 = vmatprep.subr.mxu0 0.0
    %580 = vmatpush1.msra.mxu0 %v303
    %581 = vmatprep.subr.mxu0 0.0
    %582 = vmatpush1.msra.mxu0 0.0
    %583 = vmatprep.subr.mxu0 0.0
    %584 = vmatpush1.msra.mxu0 0.0
    %585 = vmatprep.subr.mxu0 0.0
    %586 = vmatpush1.msra.mxu0 0.0
    %587 = vmatprep.subr.mxu0 0.0
    %588 = vmatpush1.msra.mxu0 0.0
    %589 = vmatprep.subr.mxu0 0.0
    %590 = vmatpush1.msra.mxu0 0.0
    %591 = vmatprep.subr.mxu0 0.0
    %592 = vmatpush1.msra.mxu0 0.0
    %593 = vmatprep.subr.mxu0 0.0
    %594 = vmatpush1.msra.mxu0 0.0
    %595 = vmatprep.subr.mxu0 0.0
    %596 = vmatpush1.msra.mxu0 0.0
    %597 = vmatprep.subr.mxu0 0.0
    %598 = vmatpush1.msra.mxu0 0.0
    %599 = vmatprep.subr.mxu0 0.0
    %600 = vmatpush1.msra.mxu0 0.0
    %601 = vmatprep.subr.mxu0 0.0
    %602 = vmatpush1.msra.mxu0 0.0
    %603 = vmatprep.subr.mxu0 0.0
    %604 = vmatpush1.msra.mxu0 0.0
    %605 = vmatprep.subr.mxu0 0.0
    %606 = vmatpush1.msra.mxu0 0.0
    %607 = vmatprep.subr.mxu0 0.0
    %608 = vmatpush1.msra.mxu0 0.0
    %609 = vmatprep.subr.mxu0 0.0
    %610 = vmatpush1.msra.mxu0 0.0
    %611 = vmatprep.subr.mxu0 0.0
    %612 = vmatpush1.msra.mxu0 0.0
    %613 = vmatprep.subr.mxu0 0.0
    %614 = vmatpush1.msra.mxu0 0.0
    %615 = vmatprep.subr.mxu0 0.0
    %616 = vmatpush1.msra.mxu0 0.0
    %617 = vmatprep.subr.mxu0 0.0
    %618 = vmatpush1.msra.mxu0 0.0
    %619 = vmatprep.subr.mxu0 0.0
    %620 = vmatpush1.msra.mxu0 0.0
    %621 = vmatprep.subr.mxu0 0.0
    %622 = vmatpush1.msra.mxu0 0.0
    %623 = vmatprep.subr.mxu0 0.0
    %624 = vmatpush1.msra.mxu0 0.0
    %625 = vmatprep.subr.mxu0 0.0
    %626 = vmatpush1.msra.mxu0 0.0
    %627 = vmatprep.subr.mxu0 0.0
    %628 = vmatpush1.msra.mxu0 0.0
    %629 = vmatprep.subr.mxu0 0.0
    %630 = vmatpush1.msra.mxu0 0.0
    %631 = vmatprep.subr.mxu0 0.0
    %632 = vmatpush1.msra.mxu0 0.0
    %633 = vmatprep.subr.mxu0 0.0
    %634 = vmatpush1.msra.mxu0 0.0
    %635 = vmatprep.subr.mxu0 0.0
    %636 = vmatpush1.msra.mxu0 0.0
    %637 = vmatprep.subr.mxu0 0.0
    %638 = vmatpush1.msra.mxu0 0.0
    %639 = vmatprep.subr.mxu0 0.0
    %640 = vmatpush1.msra.mxu0 0.0
    %641 = vmatprep.subr.mxu0 0.0
    %642 = vmatpush1.msra.mxu0 0.0
    %643 = vmatprep.mubr.f32.mxu0 0.0
    %644 = vmatmul.mubr.f32.gmra.mrb[0].mxu0 %v577
    %v645 = vpop.f32.mrb[0].mxu0
    %v646 = vadd.f32 %v573, %v645
    %v647 = vpop.f32.mrb[0].mxu0
    %648 = vdwg.mxu0
    %v649 = vadd.f32 %v646, %v378
    %650 = vst.msk [vmem:[#allocation11] sm:$0xff] %vm380, %v649
    %v651 = vld [vmem:[#allocation7] sm:$0xff]
    %v652 = vsel %vm79, %v651, 0.0
    %v653 = vrot.slane %v652, 4
    %v654 = vadd.f32 %v652, %v653
    %v655 = vrot.slane %v654, 2
    %v656 = vadd.f32 %v654, %v655
    %v657 = vrot.slane %v656, 1
    %v658 = vadd.f32 %v656, %v657
    %v659 = vmul.f32 %v658, %v87
    %v660 = vsub.f32 %v651, %v659
    %v661 = vmul.f32 %v660, %v660
    %v662 = vsel %vm79, %v661, 0.0
    %v663 = vrot.slane %v662, 4
    %v664 = vadd.f32 %v662, %v663
    %v665 = vrot.slane %v664, 2
    %v666 = vadd.f32 %v664, %v665
    %v667 = vrot.slane %v666, 1
    %v668 = vadd.f32 %v666, %v667
    %v669 = vmul.f32 %v668, %v87
    %v670 = vadd.f32 %v669, 1e-05
    %v671 = vrsqrt.pop %v670
    %v672 = vmul.f32 %v660, %v671
    %v673 = vmul.f32 %v672, %v105
    %v674 = vadd.f32 %v673, %v110
    %v676 = vsel %vm79, %v674, 0
    %678 = vmatprep.subr.mxu0 0.0
    %679 = vmatpush1.msra.mxu0 %v121
    %680 = vmatprep.subr.mxu0 0.0
    %681 = vmatpush1.msra.mxu0 0.0
    %682 = vmatprep.subr.mxu0 0.0
    %683 = vmatpush1.msra.mxu0 0.0
    %684 = vmatprep.subr.mxu0 0.0
    %685 = vmatpush1.msra.mxu0 0.0
    %686 = vmatprep.subr.mxu0 0.0
    %687 = vmatpush1.msra.mxu0 0.0
    %688 = vmatprep.subr.mxu0 0.0
    %689 = vmatpush1.msra.mxu0 0.0
    %690 = vmatprep.subr.mxu0 0.0
    %691 = vmatpush1.msra.mxu0 0.0
    %692 = vmatprep.subr.mxu0 0.0
    %693 = vmatpush1.msra.mxu0 0.0
    %694 = vmatprep.subr.mxu0 0.0
    %695 = vmatpush1.msra.mxu0 0.0
    %696 = vmatprep.subr.mxu0 0.0
    %697 = vmatpush1.msra.mxu0 0.0
    %698 = vmatprep.subr.mxu0 0.0
    %699 = vmatpush1.msra.mxu0 0.0
    %700 = vmatprep.subr.mxu0 0.0
    %701 = vmatpush1.msra.mxu0 0.0
    %702 = vmatprep.subr.mxu0 0.0
    %703 = vmatpush1.msra.mxu0 0.0
    %704 = vmatprep.subr.mxu0 0.0
    %705 = vmatpush1.msra.mxu0 0.0
    %706 = vmatprep.subr.mxu0 0.0
    %707 = vmatpush1.msra.mxu0 0.0
    %708 = vmatprep.subr.mxu0 0.0
    %709 = vmatpush1.msra.mxu0 0.0
    %710 = vmatprep.subr.mxu0 0.0
    %711 = vmatpush1.msra.mxu0 0.0
    %712 = vmatprep.subr.mxu0 0.0
    %713 = vmatpush1.msra.mxu0 0.0
    %714 = vmatprep.subr.mxu0 0.0
    %715 = vmatpush1.msra.mxu0 0.0
    %716 = vmatprep.subr.mxu0 0.0
    %717 = vmatpush1.msra.mxu0 0.0
    %718 = vmatprep.subr.mxu0 0.0
    %719 = vmatpush1.msra.mxu0 0.0
    %720 = vmatprep.subr.mxu0 0.0
    %721 = vmatpush1.msra.mxu0 0.0
    %722 = vmatprep.subr.mxu0 0.0
    %723 = vmatpush1.msra.mxu0 0.0
    %724 = vmatprep.subr.mxu0 0.0
    %725 = vmatpush1.msra.mxu0 0.0
    %726 = vmatprep.subr.mxu0 0.0
    %727 = vmatpush1.msra.mxu0 0.0
    %728 = vmatprep.subr.mxu0 0.0
    %729 = vmatpush1.msra.mxu0 0.0
    %730 = vmatprep.subr.mxu0 0.0
    %731 = vmatpush1.msra.mxu0 0.0
    %732 = vmatprep.subr.mxu0 0.0
    %733 = vmatpush1.msra.mxu0 0.0
    %734 = vmatprep.subr.mxu0 0.0
    %735 = vmatpush1.msra.mxu0 0.0
    %736 = vmatprep.subr.mxu0 0.0
    %737 = vmatpush1.msra.mxu0 0.0
    %738 = vmatprep.subr.mxu0 0.0
    %739 = vmatpush1.msra.mxu0 0.0
    %740 = vmatprep.subr.mxu0 0.0
    %741 = vmatpush1.msra.mxu0 0.0
    %742 = vmatprep.mubr.f32.mxu0 0.0
    %743 = vmatmul.mubr.f32.gmra.mrb[0].mxu0 %v676
    %v744 = vpop.f32.mrb[0].mxu0
    %v745 = vadd.f32 %v115, %v744
    %v746 = vpop.f32.mrb[0].mxu0
    %747 = vdwg.mxu0
    %v748 = vmax.f32 %v745, 0.0
    %v749 = vsel %vm194, %v748, 0.0
    %v750 = vrot.slane %v749, 4
    %v751 = vadd.f32 %v749, %v750
    %v752 = vrot.slane %v751, 2
    %v753 = vadd.f32 %v751, %v752
    %v754 = vrot.slane %v753, 1
    %v755 = vadd.f32 %v753, %v754
    %v756 = vmul.f32 %v755, %v87
    %v757 = vsub.f32 %v748, %v756
    %v758 = vmul.f32 %v757, %v757
    %v759 = vsel %vm194, %v758, 0.0
    %v760 = vrot.slane %v759, 4
    %v761 = vadd.f32 %v759, %v760
    %v762 = vrot.slane %v761, 2
    %v763 = vadd.f32 %v761, %v762
    %v764 = vrot.slane %v763, 1
    %v765 = vadd.f32 %v763, %v764
    %v766 = vmul.f32 %v765, %v87
    %v767 = vadd.f32 %v766, 1e-05
    %v768 = vrsqrt.pop %v767
    %v769 = vmul.f32 %v757, %v768
    %v770 = vmul.f32 %v769, %v219
    %v771 = vadd.f32 %v770, %v224
    %v773 = vsel %vm194, %v771, 0
    %775 = vmatprep.subr.mxu0 0.0
    %776 = vmatpush1.msra.mxu0 %v73
    %777 = vmatprep.subr.mxu0 0.0
    %778 = vmatpush1.msra.mxu0 %v74
    %779 = vmatprep.subr.mxu0 0.0
    %780 = vmatpush1.msra.mxu0 %v75
    %781 = vmatprep.subr.mxu0 0.0
    %782 = vmatpush1.msra.mxu0 %v76
    %783 = vmatprep.subr.mxu0 0.0
    %784 = vmatpush1.msra.mxu0 0.0
    %785 = vmatprep.subr.mxu0 0.0
    %786 = vmatpush1.msra.mxu0 0.0
    %787 = vmatprep.subr.mxu0 0.0
    %788 = vmatpush1.msra.mxu0 0.0
    %789 = vmatprep.subr.mxu0 0.0
    %790 = vmatpush1.msra.mxu0 0.0
    %791 = vmatprep.subr.mxu0 0.0
    %792 = vmatpush1.msra.mxu0 0.0
    %793 = vmatprep.subr.mxu0 0.0
    %794 = vmatpush1.msra.mxu0 0.0
    %795 = vmatprep.subr.mxu0 0.0
    %796 = vmatpush1.msra.mxu0 0.0
    %797 = vmatprep.subr.mxu0 0.0
    %798 = vmatpush1.msra.mxu0 0.0
    %799 = vmatprep.subr.mxu0 0.0
    %800 = vmatpush1.msra.mxu0 0.0
    %801 = vmatprep.subr.mxu0 0.0
    %802 = vmatpush1.msra.mxu0 0.0
    %803 = vmatprep.subr.mxu0 0.0
    %804 = vmatpush1.msra.mxu0 0.0
    %805 = vmatprep.subr.mxu0 0.0
    %806 = vmatpush1.msra.mxu0 0.0
    %807 = vmatprep.subr.mxu0 0.0
    %808 = vmatpush1.msra.mxu0 0.0
    %809 = vmatprep.subr.mxu0 0.0
    %810 = vmatpush1.msra.mxu0 0.0
    %811 = vmatprep.subr.mxu0 0.0
    %812 = vmatpush1.msra.mxu0 0.0
    %813 = vmatprep.subr.mxu0 0.0
    %814 = vmatpush1.msra.mxu0 0.0
    %815 = vmatprep.subr.mxu0 0.0
    %816 = vmatpush1.msra.mxu0 0.0
    %817 = vmatprep.subr.mxu0 0.0
    %818 = vmatpush1.msra.mxu0 0.0
    %819 = vmatprep.subr.mxu0 0.0
    %820 = vmatpush1.msra.mxu0 0.0
    %821 = vmatprep.subr.mxu0 0.0
    %822 = vmatpush1.msra.mxu0 0.0
    %823 = vmatprep.subr.mxu0 0.0
    %824 = vmatpush1.msra.mxu0 0.0
    %825 = vmatprep.subr.mxu0 0.0
    %826 = vmatpush1.msra.mxu0 0.0
    %827 = vmatprep.subr.mxu0 0.0
    %828 = vmatpush1.msra.mxu0 0.0
    %829 = vmatprep.subr.mxu0 0.0
    %830 = vmatpush1.msra.mxu0 0.0
    %831 = vmatprep.subr.mxu0 0.0
    %832 = vmatpush1.msra.mxu0 0.0
    %833 = vmatprep.subr.mxu0 0.0
    %834 = vmatpush1.msra.mxu0 0.0
    %835 = vmatprep.subr.mxu0 0.0
    %836 = vmatpush1.msra.mxu0 0.0
    %837 = vmatprep.subr.mxu0 0.0
    %838 = vmatpush1.msra.mxu0 0.0
    %839 = vmatprep.mubr.f32.mxu0 0.0
    %840 = vmatmul.mubr.f32.gmra.mrb[0].mxu0 %v773
    %v841 = vpop.f32.mrb[0].mxu0
    %v842 = vadd.f32 0.0, %v841
    %v843 = vpop.f32.mrb[0].mxu0
    %844 = vdwg.mxu0
    %v846 = vsel %vm79, %v651, 0
    %848 = vmatprep.subr.mxu0 0.0
    %849 = vmatpush1.msra.mxu0 %v303
    %850 = vmatprep.subr.mxu0 0.0
    %851 = vmatpush1.msra.mxu0 0.0
    %852 = vmatprep.subr.mxu0 0.0
    %853 = vmatpush1.msra.mxu0 0.0
    %854 = vmatprep.subr.mxu0 0.0
    %855 = vmatpush1.msra.mxu0 0.0
    %856 = vmatprep.subr.mxu0 0.0
    %857 = vmatpush1.msra.mxu0 0.0
    %858 = vmatprep.subr.mxu0 0.0
    %859 = vmatpush1.msra.mxu0 0.0
    %860 = vmatprep.subr.mxu0 0.0
    %861 = vmatpush1.msra.mxu0 0.0
    %862 = vmatprep.subr.mxu0 0.0
    %863 = vmatpush1.msra.mxu0 0.0
    %864 = vmatprep.subr.mxu0 0.0
    %865 = vmatpush1.msra.mxu0 0.0
    %866 = vmatprep.subr.mxu0 0.0
    %867 = vmatpush1.msra.mxu0 0.0
    %868 = vmatprep.subr.mxu0 0.0
    %869 = vmatpush1.msra.mxu0 0.0
    %870 = vmatprep.subr.mxu0 0.0
    %871 = vmatpush1.msra.mxu0 0.0
    %872 = vmatprep.subr.mxu0 0.0
    %873 = vmatpush1.msra.mxu0 0.0
    %874 = vmatprep.subr.mxu0 0.0
    %875 = vmatpush1.msra.mxu0 0.0
    %876 = vmatprep.subr.mxu0 0.0
    %877 = vmatpush1.msra.mxu0 0.0
    %878 = vmatprep.subr.mxu0 0.0
    %879 = vmatpush1.msra.mxu0 0.0
    %880 = vmatprep.subr.mxu0 0.0
    %881 = vmatpush1.msra.mxu0 0.0
    %882 = vmatprep.subr.mxu0 0.0
    %883 = vmatpush1.msra.mxu0 0.0
    %884 = vmatprep.subr.mxu0 0.0
    %885 = vmatpush1.msra.mxu0 0.0
    %886 = vmatprep.subr.mxu0 0.0
    %887 = vmatpush1.msra.mxu0 0.0
    %888 = vmatprep.subr.mxu0 0.0
    %889 = vmatpush1.msra.mxu0 0.0
    %890 = vmatprep.subr.mxu0 0.0
    %891 = vmatpush1.msra.mxu0 0.0
    %892 = vmatprep.subr.mxu0 0.0
    %893 = vmatpush1.msra.mxu0 0.0
    %894 = vmatprep.subr.mxu0 0.0
    %895 = vmatpush1.msra.mxu0 0.0
    %896 = vmatprep.subr.mxu0 0.0
    %897 = vmatpush1.msra.mxu0 0.0
    %898 = vmatprep.subr.mxu0 0.0
    %899 = vmatpush1.msra.mxu0 0.0
    %900 = vmatprep.subr.mxu0 0.0
    %901 = vmatpush1.msra.mxu0 0.0
    %902 = vmatprep.subr.mxu0 0.0
    %903 = vmatpush1.msra.mxu0 0.0
    %904 = vmatprep.subr.mxu0 0.0
    %905 = vmatpush1.msra.mxu0 0.0
    %906 = vmatprep.subr.mxu0 0.0
    %907 = vmatpush1.msra.mxu0 0.0
    %908 = vmatprep.subr.mxu0 0.0
    %909 = vmatpush1.msra.mxu0 0.0
    %910 = vmatprep.subr.mxu0 0.0
    %911 = vmatpush1.msra.mxu0 0.0
    %912 = vmatprep.mubr.f32.mxu0 0.0
    %913 = vmatmul.mubr.f32.gmra.mrb[0].mxu0 %v846
    %v914 = vpop.f32.mrb[0].mxu0
    %v915 = vadd.f32 %v842, %v914
    %v916 = vpop.f32.mrb[0].mxu0
    %917 = vdwg.mxu0
    %v918 = vadd.f32 %v915, %v378
    %919 = vst.msk [vmem:[#allocation13] sm:$0xff] %vm380, %v918
    // Predicated region
    $region34: #{triplet_net_bn2.1} parent=1 // pred_check
      _
    $region35: #{triplet_net_bn2.1} parent=1 // pred_check_branch
      %921 = sbr.rel (0) target = $region37
    $region36: #{triplet_net_bn2.1} parent=1 // pred_region
      %s923 = ssub.s32 128, 128
      %924 = vsyncadd [#allocation4], %s923
      %s926 = sshll.u32 [#allocation10], 4
      %s927 = int_to_ptr.vmem [resolvable:$true] %s926
      %929 = dma.vmem_to_hbm [thread:$0]  %s927, 128, %s4, [#allocation4]
    $region37: #{triplet_net_bn2.1} parent=1 // pred_fallthru
      _
    // Predicated region
    $region38: #{triplet_net_bn2.1} parent=1 // pred_check
      _
    $region39: #{triplet_net_bn2.1} parent=1 // pred_check_branch
      %931 = sbr.rel (0) target = $region41
    $region40: #{triplet_net_bn2.1} parent=1 // pred_region
      %s933 = ssub.s32 128, 128
      %934 = vsyncadd [#allocation12], %s933
      %s936 = sshll.u32 [#allocation11], 4
      %s937 = int_to_ptr.vmem [resolvable:$true] %s936
      %939 = dma.vmem_to_hbm [thread:$0]  %s937, 128, %s5, [#allocation12]
    $region41: #{triplet_net_bn2.1} parent=1 // pred_fallthru
      _
    // Predicated region
    $region42: #{triplet_net_bn2.1} parent=1 // pred_check
      _
    $region43: #{triplet_net_bn2.1} parent=1 // pred_check_branch
      %941 = sbr.rel (0) target = $region45
    $region44: #{triplet_net_bn2.1} parent=1 // pred_region
      %s943 = ssub.s32 128, 128
      %944 = vsyncadd [#allocation12], %s943
      %s946 = sshll.u32 [#allocation13], 4
      %s947 = int_to_ptr.vmem [resolvable:$true] %s946
      %949 = dma.vmem_to_hbm [thread:$0]  %s947, 128, %s6, [#allocation12]
    $region45: #{triplet_net_bn2.1} parent=1 // pred_fallthru
      _
    // Predicated region
    $region46: #{triplet_net_bn2.1} parent=1 // pred_check
      _
    $region47: #{triplet_net_bn2.1} parent=1 // pred_check_branch
      %951 = sbr.rel (0) target = $region49
    $region48: #{triplet_net_bn2.1} parent=1 // pred_region
      %952 = dma.done [#allocation4], 128
    $region49: #{triplet_net_bn2.1} parent=1 // pred_fallthru
      _
    // Predicated region
    $region50: #{triplet_net_bn2.1} parent=1 // pred_check
      _
    $region51: #{triplet_net_bn2.1} parent=1 // pred_check_branch
      %954 = sbr.rel (0) target = $region53
    $region52: #{triplet_net_bn2.1} parent=1 // pred_region
      %955 = dma.done [#allocation12], 128
    $region53: #{triplet_net_bn2.1} parent=1 // pred_fallthru
      _
    // Predicated region
    $region54: #{triplet_net_bn2.1} parent=1 // pred_check
      _
    $region55: #{triplet_net_bn2.1} parent=1 // pred_check_branch
      %957 = sbr.rel (0) target = $region57
    $region56: #{triplet_net_bn2.1} parent=1 // pred_region
      %958 = dma.done [#allocation12], 128
    $region57: #{triplet_net_bn2.1} parent=1 // pred_fallthru
      _
    %959 = vsyncpa [#allocation3], 1
    %960 = vsyncpa [#allocation6], 1
    %961 = vsyncpa [#allocation9], 1
    %962 = vsyncpa [#allocation4], 1
    %963 = vsyncpa [#allocation12], 1

</llo_original>
